<compile_context>
chip_gen: v7x
topology: tpu7x:2x2x1
jax: 0.10.0
libtpu: 0.0.40
codegen_flags: <defaults>
</compile_context>

<pallas_src>
import functools

import jax
import jax.numpy as jnp
from jax import lax
from jax.experimental import pallas as pl
from jax.experimental.pallas import tpu as pltpu


def _ssd_loss_kernel(loc_p_ref, loc_t_ref, conf_ref, cls_ref, out_ref, *,
                     bn, tm, tiles_per_chunk):
    # loc_p_ref, loc_t_ref : (4, TM)   box regression preds / targets
    # conf_ref             : (C, TM)   class logits
    # cls_ref              : (1, TM)   int32 target class ids (0 = background)
    # out_ref              : (1, 3, TM) f32 per-chunk lane-wise partial sums
    #                        row 0 = loc_loss, row 1 = conf_loss, row 2 = num_pos
    p = pl.program_id(0)
    t = pl.program_id(1)

    @pl.when(t == 0)
    def _init():
        out_ref[...] = jnp.zeros_like(out_ref)

    # native-dtype load, f32 arithmetic in-register
    loc_p = loc_p_ref[...].astype(jnp.float32)                 # (4, TM)
    loc_t = loc_t_ref[...].astype(jnp.float32)                 # (4, TM)
    conf = conf_ref[...].astype(jnp.float32)                   # (C, TM)
    cls = cls_ref[...]                                         # (1, TM) int32

    # mask anchors that only exist because of lane padding (bn is static)
    col = lax.broadcasted_iota(jnp.int32, (1, tm), 1)
    gcol = (p * tiles_per_chunk + t) * tm + col
    valid = (gcol < bn).astype(jnp.float32)                    # (1, TM)

    pos = jnp.where(cls > 0, 1.0, 0.0) * valid                 # (1, TM)

    # Smooth-L1 localization loss on positive anchors
    d = loc_p - loc_t
    ad = jnp.abs(d)
    sl1 = jnp.where(ad < 1.0, 0.5 * d * d, ad - 0.5)           # (4, TM)
    loc_row = jnp.sum(sl1, axis=0, keepdims=True) * pos        # (1, TM)

    # softmax cross-entropy: ce = logsumexp(conf) - conf[label]
    m = jnp.max(conf, axis=0, keepdims=True)                   # (1, TM)
    lse = jnp.log(jnp.sum(jnp.exp(conf - m), axis=0, keepdims=True)) + m
    cls_iota = lax.broadcasted_iota(jnp.int32, conf.shape, 0)  # (C, TM)
    sel = jnp.sum(jnp.where(cls_iota == cls, conf, 0.0), axis=0, keepdims=True)
    ce_row = (lse - sel) * valid                               # (1, TM)

    # lane-wise VPU accumulation into the resident output block; the
    # cross-lane reduce is deferred to the (tiny) JAX-side combine.
    out_ref[0:1, 0:1, :] += loc_row[None]
    out_ref[0:1, 1:2, :] += ce_row[None]
    out_ref[0:1, 2:3, :] += pos[None]


def ssd_loss(predictions, targets, *, num_chunks=2, max_tile=4096):
    """predictions = (loc_preds [B,N,4], conf_preds [B,N,C])
       targets     = (loc_targets [B,N,4], labels [B,N] int)
       returns scalar f32 loss."""
    loc_preds, conf_preds = predictions
    loc_targets, labels = targets

    B, N, _ = loc_preds.shape
    C = conf_preds.shape[-1]
    BN = B * N

    # lane-dense layout: anchors on the lane (last) axis; keep native dtypes
    # (no wrapper-side f32 upcast — halves HBM traffic for bf16 models).
    loc_p = loc_preds.reshape(BN, 4).T            # (4, BN)
    loc_t = loc_targets.reshape(BN, 4).T          # (4, BN)
    conf = conf_preds.reshape(BN, C).T            # (C, BN)
    cls = labels.reshape(1, BN).astype(jnp.int32)

    # tile sizing: anchor tiles are multiples of 128 lanes.
    # v7x: small-ish tiles (<=4K anchors) fit 64 MiB VMEM comfortably;
    # v6e/v5e: bump max_tile (8K-16K) and vmem_limit_bytes for fewer steps.
    per_chunk = pl.cdiv(BN, num_chunks)
    tm = min(max_tile, ((per_chunk + 127) // 128) * 128)
    tiles_per_chunk = pl.cdiv(per_chunk, tm)
    bn_pad = num_chunks * tiles_per_chunk * tm

    pad = bn_pad - BN
    if pad:
        loc_p = jnp.pad(loc_p, ((0, 0), (0, pad)))
        loc_t = jnp.pad(loc_t, ((0, 0), (0, pad)))
        conf = jnp.pad(conf, ((0, 0), (0, pad)))
        cls = jnp.pad(cls, ((0, 0), (0, pad)))

    kernel = functools.partial(_ssd_loss_kernel, bn=BN, tm=tm,
                               tiles_per_chunk=tiles_per_chunk)

    lane_map = lambda p, t: (0, p * tiles_per_chunk + t)
    out_map = lambda p, t: (p, 0, 0)

    in_bytes = (loc_p.size * loc_p.dtype.itemsize
                + loc_t.size * loc_t.dtype.itemsize
                + conf.size * conf.dtype.itemsize
                + cls.size * cls.dtype.itemsize)

    parts = pl.pallas_call(
        kernel,
        out_shape=jax.ShapeDtypeStruct((num_chunks, 3, tm), jnp.float32),
        grid_spec=pltpu.PrefetchScalarGridSpec(
            num_scalar_prefetch=0,
            grid=(num_chunks, tiles_per_chunk),
            in_specs=[
                pl.BlockSpec((4, tm), lane_map),
                pl.BlockSpec((4, tm), lane_map),
                pl.BlockSpec((C, tm), lane_map),
                pl.BlockSpec((1, tm), lane_map),
            ],
            out_specs=pl.BlockSpec((1, 3, tm), out_map),
        ),
        compiler_params=pltpu.CompilerParams(
            dimension_semantics=("parallel", "arbitrary"),
        ),
        cost_estimate=pl.CostEstimate(
            flops=BN * (16 + 6 * C),
            transcendentals=BN * (C + 1),
            bytes_accessed=in_bytes + num_chunks * 3 * tm * 4,
        ),
    )(loc_p, loc_t, conf, cls)

    sums = jnp.sum(parts, axis=(0, 2))                         # (3,)
    loc_loss, conf_loss, num_pos = sums[0], sums[1], sums[2]
    return (loc_loss + conf_loss) / jnp.maximum(num_pos, 1.0)


def _ssd_loss_ref(predictions, targets):
    """Pure-JAX reference for sanity checking."""
    loc_preds, conf_preds = predictions
    loc_targets, labels = targets
    B, N, _ = loc_preds.shape
    C = conf_preds.shape[-1]
    loc_p = loc_preds.reshape(-1, 4).astype(jnp.float32)
    loc_t = loc_targets.reshape(-1, 4).astype(jnp.float32)
    conf = conf_preds.reshape(-1, C).astype(jnp.float32)
    cls = labels.reshape(-1)
    pos = (cls > 0).astype(jnp.float32)
    d = loc_p - loc_t
    ad = jnp.abs(d)
    sl1 = jnp.where(ad < 1.0, 0.5 * d * d, ad - 0.5)
    loc_loss = jnp.sum(sl1 * pos[:, None])
    logp = jax.nn.log_softmax(conf, axis=-1)
    ce = -jnp.take_along_axis(logp, cls[:, None], axis=-1)[:, 0]
    conf_loss = jnp.sum(ce)
    return (loc_loss + conf_loss) / jnp.maximum(jnp.sum(pos), 1.0)


if __name__ == "__main__":
    key = jax.random.PRNGKey(0)
    k1, k2, k3, k4 = jax.random.split(key, 4)

    B, N, C = 2, 128, 8  # batch, anchors per image, num classes (0=background)

    loc_preds = jax.random.normal(k1, (B, N, 4), dtype=jnp.float32)
    conf_preds = jax.random.normal(k2, (B, N, C), dtype=jnp.float32)
    loc_targets = jax.random.normal(k3, (B, N, 4), dtype=jnp.float32)
    labels = jax.random.randint(k4, (B, N), 0, C, dtype=jnp.int32)

    predictions = (loc_preds, conf_preds)
    targets = (loc_targets, labels)

    loss = ssd_loss(predictions, targets)
    jax.block_until_ready(loss)

    ref = _ssd_loss_ref(predictions, targets)
    assert jnp.allclose(loss, ref, rtol=1e-4, atol=1e-4), (loss, ref)

    print("KERNEL_OK")
</pallas_src>

<mosaic_0001>
module attributes {stable_mosaic.version = 11 : i64} {
  func.func @_ssd_loss_kernel(%arg0: i32, %arg1: i32, %arg2: memref<4x128xf32, #tpu.memory_space<vmem>>, %arg3: memref<4x128xf32, #tpu.memory_space<vmem>>, %arg4: memref<8x128xf32, #tpu.memory_space<vmem>>, %arg5: memref<1x128xi32, #tpu.memory_space<vmem>>, %arg6: memref<1x3x128xf32, #tpu.memory_space<vmem>>) attributes {dimension_semantics = [#tpu.dimension_semantics<parallel>, #tpu.dimension_semantics<arbitrary>], iteration_bounds = array<i64: 2, 1>, scalar_prefetch = 0 : i64, scratch_operands = 0 : i64, tpu.core_type = #tpu.core_type<tc>, window_params = [{transform_indices = @transform_0, window_bounds = array<i64: 4, 128>}, {transform_indices = @transform_1, window_bounds = array<i64: 4, 128>}, {transform_indices = @transform_2, window_bounds = array<i64: 8, 128>}, {transform_indices = @transform_3, window_bounds = array<i64: 1, 128>}, {transform_indices = @transform_4, window_bounds = array<i64: 1, 3, 128>}]} {
    %c0_i32 = arith.constant 0 : i32
    %0 = arith.cmpi eq, %arg1, %c0_i32 : i32
    %1 = arith.extui %0 : i1 to i32
    %c0_i32_0 = arith.constant 0 : i32
    %2 = arith.cmpi ne, %1, %c0_i32_0 : i32
    scf.if %2 {
      %cst_34 = arith.constant 0.000000e+00 : f32
      %66 = vector.broadcast %cst_34 : f32 to vector<1x3x128xf32>
      %c0_35 = arith.constant 0 : index
      %c0_36 = arith.constant 0 : index
      %c0_37 = arith.constant 0 : index
      %67 = vector.load %arg6[%c0_35, %c0_36, %c0_37] : memref<1x3x128xf32, #tpu.memory_space<vmem>>, vector<1x3x128xf32>
      tpu.vector_store %arg6[%c0_35, %c0_36, %c0_37], %66 {strides = array<i32>} : memref<1x3x128xf32, #tpu.memory_space<vmem>>, vector<1x3x128xf32>,
    } else {
    }
    %c0 = arith.constant 0 : index
    %c0_1 = arith.constant 0 : index
    %3 = vector.load %arg2[%c0, %c0_1] : memref<4x128xf32, #tpu.memory_space<vmem>>, vector<4x128xf32>
    %c0_2 = arith.constant 0 : index
    %c0_3 = arith.constant 0 : index
    %4 = vector.load %arg3[%c0_2, %c0_3] : memref<4x128xf32, #tpu.memory_space<vmem>>, vector<4x128xf32>
    %c0_4 = arith.constant 0 : index
    %c0_5 = arith.constant 0 : index
    %5 = vector.load %arg4[%c0_4, %c0_5] : memref<8x128xf32, #tpu.memory_space<vmem>>, vector<8x128xf32>
    %c0_6 = arith.constant 0 : index
    %c0_7 = arith.constant 0 : index
    %6 = vector.load %arg5[%c0_6, %c0_7] : memref<1x128xi32, #tpu.memory_space<vmem>>, vector<1x128xi32>
    %7 = tpu.iota {dimensions = array<i32: 1>} : vector<1x128xi32>
    %c1_i32 = arith.constant 1 : i32
    %8 = arith.muli %arg0, %c1_i32 : i32
    %9 = arith.addi %8, %arg1 : i32
    %c128_i32 = arith.constant 128 : i32
    %10 = arith.muli %9, %c128_i32 : i32
    %11 = vector.broadcast %10 : i32 to vector<1x128xi32>
    %12 = arith.addi %11, %7 : vector<1x128xi32>
    %c256_i32 = arith.constant 256 : i32
    %13 = vector.broadcast %c256_i32 : i32 to vector<1x128xi32>
    %14 = arith.cmpi slt, %12, %13 : vector<1x128xi32>
    %15 = arith.extui %14 : vector<1x128xi1> to vector<1x128xi32>
    %16 = arith.sitofp %15 : vector<1x128xi32> to vector<1x128xf32>
    %c0_i32_8 = arith.constant 0 : i32
    %17 = vector.broadcast %c0_i32_8 : i32 to vector<1x128xi32>
    %18 = arith.cmpi sgt, %6, %17 : vector<1x128xi32>
    %cst = arith.constant 1.000000e+00 : f32
    %cst_9 = arith.constant 0.000000e+00 : f32
    %19 = vector.broadcast %cst : f32 to vector<1x128xf32>
    %20 = vector.broadcast %cst_9 : f32 to vector<1x128xf32>
    %21 = arith.select %18, %19, %20 : vector<1x128xi1>, vector<1x128xf32>
    %22 = arith.mulf %21, %16 : vector<1x128xf32>
    %23 = arith.subf %3, %4 : vector<4x128xf32>
    %24 = math.absf %23 : vector<4x128xf32>
    %cst_10 = arith.constant 1.000000e+00 : f32
    %25 = vector.broadcast %cst_10 : f32 to vector<4x128xf32>
    %26 = arith.cmpf olt, %24, %25 : vector<4x128xf32>
    %cst_11 = arith.constant 5.000000e-01 : f32
    %27 = vector.broadcast %cst_11 : f32 to vector<4x128xf32>
    %28 = arith.mulf %27, %23 : vector<4x128xf32>
    %29 = arith.mulf %28, %23 : vector<4x128xf32>
    %cst_12 = arith.constant 5.000000e-01 : f32
    %30 = vector.broadcast %cst_12 : f32 to vector<4x128xf32>
    %31 = arith.subf %24, %30 : vector<4x128xf32>
    %32 = arith.select %26, %29, %31 : vector<4x128xi1>, vector<4x128xf32>
    %cst_13 = arith.constant dense<0.000000e+00> : vector<128xf32>
    %33 = vector.multi_reduction <add>, %32, %cst_13 [0] : vector<4x128xf32> to vector<128xf32>
    %34 = vector.shape_cast %33 : vector<128xf32> to vector<1x128xf32>
    %35 = arith.mulf %34, %22 : vector<1x128xf32>
    %cst_14 = arith.constant dense<0xFF800000> : vector<128xf32>
    %36 = vector.multi_reduction <maximumf>, %5, %cst_14 [0] : vector<8x128xf32> to vector<128xf32>
    %37 = vector.shape_cast %36 : vector<128xf32> to vector<1x128xf32>
    %38 = vector.broadcast %37 : vector<1x128xf32> to vector<8x128xf32>
    %39 = arith.subf %5, %38 : vector<8x128xf32>
    %40 = math.exp %39 : vector<8x128xf32>
    %cst_15 = arith.constant dense<0.000000e+00> : vector<128xf32>
    %41 = vector.multi_reduction <add>, %40, %cst_15 [0] : vector<8x128xf32> to vector<128xf32>
    %42 = vector.shape_cast %41 : vector<128xf32> to vector<1x128xf32>
    %43 = math.log %42 : vector<1x128xf32>
    %44 = arith.addf %43, %37 : vector<1x128xf32>
    %45 = tpu.iota {dimensions = array<i32: 0>} : vector<8x128xi32>
    %46 = vector.broadcast %6 : vector<1x128xi32> to vector<8x128xi32>
    %47 = arith.cmpi eq, %45, %46 : vector<8x128xi32>
    %cst_16 = arith.constant 0.000000e+00 : f32
    %48 = vector.broadcast %cst_16 : f32 to vector<8x128xf32>
    %49 = arith.select %47, %5, %48 : vector<8x128xi1>, vector<8x128xf32>
    %cst_17 = arith.constant dense<0.000000e+00> : vector<128xf32>
    %50 = vector.multi_reduction <add>, %49, %cst_17 [0] : vector<8x128xf32> to vector<128xf32>
    %51 = vector.shape_cast %50 : vector<128xf32> to vector<1x128xf32>
    %52 = arith.subf %44, %51 : vector<1x128xf32>
    %53 = arith.mulf %52, %16 : vector<1x128xf32>
    %c0_18 = arith.constant 0 : index
    %c0_19 = arith.constant 0 : index
    %c0_20 = arith.constant 0 : index
    %54 = vector.load %arg6[%c0_18, %c0_19, %c0_20] : memref<1x3x128xf32, #tpu.memory_space<vmem>>, vector<1x1x128xf32>
    %55 = vector.shape_cast %35 : vector<1x128xf32> to vector<1x1x128xf32>
    %56 = arith.addf %54, %55 : vector<1x1x128xf32>
    %c0_21 = arith.constant 0 : index
    %c0_22 = arith.constant 0 : index
    %c0_23 = arith.constant 0 : index
    %57 = vector.load %arg6[%c0_21, %c0_22, %c0_23] : memref<1x3x128xf32, #tpu.memory_space<vmem>>, vector<1x1x128xf32>
    tpu.vector_store %arg6[%c0_21, %c0_22, %c0_23], %56 {strides = array<i32>} : memref<1x3x128xf32, #tpu.memory_space<vmem>>, vector<1x1x128xf32>,
    %c0_24 = arith.constant 0 : index
    %c1 = arith.constant 1 : index
    %c0_25 = arith.constant 0 : index
    %58 = vector.load %arg6[%c0_24, %c1, %c0_25] : memref<1x3x128xf32, #tpu.memory_space<vmem>>, vector<1x1x128xf32>
    %59 = vector.shape_cast %53 : vector<1x128xf32> to vector<1x1x128xf32>
    %60 = arith.addf %58, %59 : vector<1x1x128xf32>
    %c0_26 = arith.constant 0 : index
    %c1_27 = arith.constant 1 : index
    %c0_28 = arith.constant 0 : index
    %61 = vector.load %arg6[%c0_26, %c1_27, %c0_28] : memref<1x3x128xf32, #tpu.memory_space<vmem>>, vector<1x1x128xf32>
    tpu.vector_store %arg6[%c0_26, %c1_27, %c0_28], %60 {strides = array<i32>} : memref<1x3x128xf32, #tpu.memory_space<vmem>>, vector<1x1x128xf32>,
    %c0_29 = arith.constant 0 : index
    %c2 = arith.constant 2 : index
    %c0_30 = arith.constant 0 : index
    %62 = vector.load %arg6[%c0_29, %c2, %c0_30] : memref<1x3x128xf32, #tpu.memory_space<vmem>>, vector<1x1x128xf32>
    %63 = vector.shape_cast %22 : vector<1x128xf32> to vector<1x1x128xf32>
    %64 = arith.addf %62, %63 : vector<1x1x128xf32>
    %c0_31 = arith.constant 0 : index
    %c2_32 = arith.constant 2 : index
    %c0_33 = arith.constant 0 : index
    %65 = vector.load %arg6[%c0_31, %c2_32, %c0_33] : memref<1x3x128xf32, #tpu.memory_space<vmem>>, vector<1x1x128xf32>
    tpu.vector_store %arg6[%c0_31, %c2_32, %c0_33], %64 {strides = array<i32>} : memref<1x3x128xf32, #tpu.memory_space<vmem>>, vector<1x1x128xf32>,
    return
  }
  func.func @transform_0(%arg0: i32, %arg1: i32) -> (i32, i32) {
    %c1_i32 = arith.constant 1 : i32
    %0 = arith.muli %arg0, %c1_i32 : i32
    %1 = arith.addi %0, %arg1 : i32
    %c0_i32 = arith.constant 0 : i32
    %c0_i32_0 = arith.constant 0 : i32
    return %c0_i32, %1 : i32, i32
  }
  func.func @transform_1(%arg0: i32, %arg1: i32) -> (i32, i32) {
    %c1_i32 = arith.constant 1 : i32
    %0 = arith.muli %arg0, %c1_i32 : i32
    %1 = arith.addi %0, %arg1 : i32
    %c0_i32 = arith.constant 0 : i32
    %c0_i32_0 = arith.constant 0 : i32
    return %c0_i32, %1 : i32, i32
  }
  func.func @transform_2(%arg0: i32, %arg1: i32) -> (i32, i32) {
    %c1_i32 = arith.constant 1 : i32
    %0 = arith.muli %arg0, %c1_i32 : i32
    %1 = arith.addi %0, %arg1 : i32
    %c0_i32 = arith.constant 0 : i32
    %c0_i32_0 = arith.constant 0 : i32
    return %c0_i32, %1 : i32, i32
  }
  func.func @transform_3(%arg0: i32, %arg1: i32) -> (i32, i32) {
    %c1_i32 = arith.constant 1 : i32
    %0 = arith.muli %arg0, %c1_i32 : i32
    %1 = arith.addi %0, %arg1 : i32
    %c0_i32 = arith.constant 0 : i32
    %c0_i32_0 = arith.constant 0 : i32
    return %c0_i32, %1 : i32, i32
  }
  func.func @transform_4(%arg0: i32, %arg1: i32) -> (i32, i32, i32) {
    %c0_i32 = arith.constant 0 : i32
    %c0_i32_0 = arith.constant 0 : i32
    %c0_i32_1 = arith.constant 0 : i32
    return %arg0, %c0_i32, %c0_i32_0 : i32, i32, i32
  }
}

</mosaic_0001>

<llo_original>
// kernel: tpu_custom_call.1
$region0: #{tpu_custom_call.1}
  #allocation0 [shape = 'u32[]', space=smem, size = 0x4, offset = 0x4, fixed_abs, tag = 'smem constant byte address 0x4 - core index']
  #allocation1 [shape = 'u32[144,128]{1,0:T(1,128)}', space=vmem, size = 0x12000, scoped, tag = 'internal scratch']
  %s0 = inlined_call_operand.hbm [shape: f32[4,256], index: 0, kind: input, shape index: {}]
  %s1 = inlined_call_operand.hbm [shape: f32[4,256], index: 1, kind: input, shape index: {}]
  %s2 = inlined_call_operand.hbm [shape: f32[8,256], index: 2, kind: input, shape index: {}]
  %s3 = inlined_call_operand.vmem [shape: s32[1,256], index: 3, kind: input, shape index: {}]
  %s4 = inlined_call_operand.vmem [shape: f32[2,3,128], index: 4, kind: output, shape index: {}]
  %s5 = sld [smem:[#allocation0]]
  $region65: #{tpu_custom_call.1} parent=0
    _
  %s7 = ssub.s32 1, %s5
  %s8 = scalar_select 0, %s7, %s5
  $region1: #{tpu_custom_call.1} parent=0
    #allocation2 [shape = 'u8[4096]{0}', space=vmem, size = 0x1000, scoped, tag = 'input window, operand 0']
    #allocation3 [shape = 's32[2]{0}', space=sflag, size = 0x8, scoped, tag = 'scoped memory for tpu_custom_call.1']
    #allocation4 [shape = 'u8[4096]{0}', space=vmem, size = 0x1000, scoped, tag = 'input window, operand 1']
    #allocation5 [shape = 's32[2]{0}', space=sflag, size = 0x8, scoped, tag = 'scoped memory for tpu_custom_call.1']
    #allocation6 [shape = 'u8[8192]{0}', space=vmem, size = 0x2000, scoped, tag = 'input window, operand 2']
    %9 = vsyncpa [#allocation3], 0
    %s10 = scalar_lea.sflag [#allocation3], 1
    %11 = vsyncpa %s10, 0
    %12 = vsyncpa [#allocation5], 0
    %s13 = scalar_lea.sflag [#allocation5], 1
    %14 = vsyncpa %s13, 0
    loop: start=0, step=1, limit=4
    $region2: #{tpu_custom_call.1} parent=1 // loop_pre_header
      _
    $region3: #{tpu_custom_call.1} parent=1 // loop_header
      %s16 = sphi 0, %s20
      %p17 = scmp.ge.s32.totalorder %s16, 4
      %s23 = sphi 0, %s35
      %s24 = sphi 0, %s31
      %s25 = sphi 0, %s23
      %s26 = sphi 0, %s24
      %s27 = sphi 0, %s25
      %s28 = sphi 0, %s26
      %s40 = sphi 0, %s42
      %s43 = sphi 0, %s40
      %s44 = sphi 0, %s43
      %s60 = sphi 0, %s44
      %s68 = sphi 0, %s70
      %s71 = sphi 0, %s68
      %s72 = sphi 0, %s71
      %s88 = sphi 0, %s72
      %s96 = sphi 0, %s98
      %s99 = sphi 0, %s96
      %s100 = sphi 0, %s99
      %s116 = sphi 0, %s100
      %s124 = sphi 0, %s126
      %s127 = sphi 0, %s124
      %s128 = sphi 0, %s127
      %s144 = sphi 0, %s128
      %s150 = sphi 0, %s152
      %s153 = sphi 0, %s150
      %s154 = sphi 0, %s153
      %s170 = sphi 0, %s154
    $region4: #{tpu_custom_call.1} parent=1 // loop_header_branch
      %19 = sbr.rel (%p17) target = $region8
    $region5: #{tpu_custom_call.1} parent=1 // loop_body
      %s21 = ssub.s32 %s16, 1
      %s22 = ssub.s32 %s16, 2
      %s29 = sadd.s32 1, %s24
      %p30 = scmp.ge.s32.totalorder %s29, 1
      %s31 = scalar_select %p30, 0, %s29
      %s32 = sadd.s32 1, %s23
      %s33 = scalar_select %p30, %s32, %s23
      %p34 = scmp.ge.s32.totalorder %s33, 2
      %s35 = scalar_select %p34, 0, %s33
      %s36 = sadd.s32 %s23, %s24
      %s37 = sadd.s32 %s35, %s31
      %s38 = ssub.s32 %s36, %s37
      %p39 = scmp.eq.s32.totalorder %s38, 0
      %s41 = sadd.s32 %s40, 1
      %s42 = scalar_select %p39, %s40, %s41
      %p45 = pneg %p39
      %p46 = scmp.eq.s32.totalorder %s16, 1
      %p47 = por %p45, %p46
      %p48 = scmp.ne.s32.totalorder %s40, %s43
      %p49 = scmp.eq.s32.totalorder %s16, 0
      %p50 = por %p48, %p49
      %p51 = scmp.ne.s32.totalorder %s40, %s43
      %p52 = scmp.eq.s32.totalorder %s21, 1
      %p53 = por %p51, %p52
      %p54 = scmp.ne.s32.totalorder %s43, %s44
      %p55 = scmp.eq.s32.totalorder %s21, 0
      %p56 = por %p54, %p55
      %p57 = scmp.ne.s32.totalorder %s43, %s44
      %p58 = scmp.eq.s32.totalorder %s22, 1
      %p59 = por %p57, %p58
      %p61 = scmp.ne.s32.totalorder %s44, %s60
      %p62 = scmp.eq.s32.totalorder %s22, 0
      %p63 = por %p61, %p62
      %s64 = sadd.s32 %s23, %s24
      %s65 = sadd.s32 %s35, %s31
      %s66 = ssub.s32 %s64, %s65
      %p67 = scmp.eq.s32.totalorder %s66, 0
      %s69 = sadd.s32 %s68, 1
      %s70 = scalar_select %p67, %s68, %s69
      %p73 = pneg %p67
      %p74 = scmp.eq.s32.totalorder %s16, 1
      %p75 = por %p73, %p74
      %p76 = scmp.ne.s32.totalorder %s68, %s71
      %p77 = scmp.eq.s32.totalorder %s16, 0
      %p78 = por %p76, %p77
      %p79 = scmp.ne.s32.totalorder %s68, %s71
      %p80 = scmp.eq.s32.totalorder %s21, 1
      %p81 = por %p79, %p80
      %p82 = scmp.ne.s32.totalorder %s71, %s72
      %p83 = scmp.eq.s32.totalorder %s21, 0
      %p84 = por %p82, %p83
      %p85 = scmp.ne.s32.totalorder %s71, %s72
      %p86 = scmp.eq.s32.totalorder %s22, 1
      %p87 = por %p85, %p86
      %p89 = scmp.ne.s32.totalorder %s72, %s88
      %p90 = scmp.eq.s32.totalorder %s22, 0
      %p91 = por %p89, %p90
      %s92 = sadd.s32 %s23, %s24
      %s93 = sadd.s32 %s35, %s31
      %s94 = ssub.s32 %s92, %s93
      %p95 = scmp.eq.s32.totalorder %s94, 0
      %s97 = sadd.s32 %s96, 1
      %s98 = scalar_select %p95, %s96, %s97
      %p101 = pneg %p95
      %p102 = scmp.eq.s32.totalorder %s16, 1
      %p103 = por %p101, %p102
      %p104 = scmp.ne.s32.totalorder %s96, %s99
      %p105 = scmp.eq.s32.totalorder %s16, 0
      %p106 = por %p104, %p105
      %p107 = scmp.ne.s32.totalorder %s96, %s99
      %p108 = scmp.eq.s32.totalorder %s21, 1
      %p109 = por %p107, %p108
      %p110 = scmp.ne.s32.totalorder %s99, %s100
      %p111 = scmp.eq.s32.totalorder %s21, 0
      %p112 = por %p110, %p111
      %p113 = scmp.ne.s32.totalorder %s99, %s100
      %p114 = scmp.eq.s32.totalorder %s22, 1
      %p115 = por %p113, %p114
      %p117 = scmp.ne.s32.totalorder %s100, %s116
      %p118 = scmp.eq.s32.totalorder %s22, 0
      %p119 = por %p117, %p118
      %s120 = sadd.s32 %s23, %s24
      %s121 = sadd.s32 %s35, %s31
      %s122 = ssub.s32 %s120, %s121
      %p123 = scmp.eq.s32.totalorder %s122, 0
      %s125 = sadd.s32 %s124, 1
      %s126 = scalar_select %p123, %s124, %s125
      %p129 = pneg %p123
      %p130 = scmp.eq.s32.totalorder %s16, 1
      %p131 = por %p129, %p130
      %p132 = scmp.ne.s32.totalorder %s124, %s127
      %p133 = scmp.eq.s32.totalorder %s16, 0
      %p134 = por %p132, %p133
      %p135 = scmp.ne.s32.totalorder %s124, %s127
      %p136 = scmp.eq.s32.totalorder %s21, 1
      %p137 = por %p135, %p136
      %p138 = scmp.ne.s32.totalorder %s127, %s128
      %p139 = scmp.eq.s32.totalorder %s21, 0
      %p140 = por %p138, %p139
      %p141 = scmp.ne.s32.totalorder %s127, %s128
      %p142 = scmp.eq.s32.totalorder %s22, 1
      %p143 = por %p141, %p142
      %p145 = scmp.ne.s32.totalorder %s128, %s144
      %p146 = scmp.eq.s32.totalorder %s22, 0
      %p147 = por %p145, %p146
      %s148 = ssub.s32 %s23, %s35
      %p149 = scmp.eq.s32.totalorder %s148, 0
      %s151 = sadd.s32 %s150, 1
      %s152 = scalar_select %p149, %s150, %s151
      %p155 = pneg %p149
      %p156 = scmp.eq.s32.totalorder %s16, 1
      %p157 = por %p155, %p156
      %p158 = scmp.ne.s32.totalorder %s150, %s153
      %p159 = scmp.eq.s32.totalorder %s16, 0
      %p160 = por %p158, %p159
      %p161 = scmp.ne.s32.totalorder %s150, %s153
      %p162 = scmp.eq.s32.totalorder %s21, 1
      %p163 = por %p161, %p162
      %p164 = scmp.ne.s32.totalorder %s153, %s154
      %p165 = scmp.eq.s32.totalorder %s21, 0
      %p166 = por %p164, %p165
      %p167 = scmp.ne.s32.totalorder %s153, %s154
      %p168 = scmp.eq.s32.totalorder %s22, 1
      %p169 = por %p167, %p168
      %p171 = scmp.ne.s32.totalorder %s154, %s170
      %p172 = scmp.eq.s32.totalorder %s22, 0
      %p173 = por %p171, %p172
      %p174 = scmp.le.s32.totalorder 1, %s16
      %p175 = scmp.lt.s32.totalorder %s16, 3
      %p176 = pnand %p174, %p175
      %p177 = pneg %p176
      // Predicated region
      $region9: #{tpu_custom_call.1} parent=5 // pred_check
        _
      $region10: #{tpu_custom_call.1} parent=5 // pred_check_branch
        %179 = sbr.rel (%p176) target = $region12
      $region11: #{tpu_custom_call.1} parent=5 // pred_region
        %s180 = ssub.s32 %s16, 1
      $region12: #{tpu_custom_call.1} parent=5 // pred_fallthru
        _
      %p181 = scmp.lt.s32.totalorder %s16, 2
      // Predicated region
      $region13: #{tpu_custom_call.1} parent=5 // pred_check
        %p182 = pneg %p181
      $region14: #{tpu_custom_call.1} parent=5 // pred_check_branch
        %184 = sbr.rel (%p182) target = $region16
      $region15: #{tpu_custom_call.1} parent=5 // pred_region
        // Predicated region
        $region17: #{tpu_custom_call.1} parent=15 // pred_check
          %p185 = pneg %p50
        $region18: #{tpu_custom_call.1} parent=15 // pred_check_branch
          %187 = sbr.rel (%p185) target = $region20
        $region19: #{tpu_custom_call.1} parent=15 // pred_region
          %s188 = sand.u32 %s40, 1
          %s189 = scalar_lea.sflag [#allocation3], %s188
          %s190 = sand.u32 %s40, 1
          %s191 = smul.addr %s190, 4
          %s192 = scalar_lea.vmem [#allocation2], %s191
          %s193 = sadd.s32 %s23, %s24
          %s195 = ssub.s32 64, 64
          %196 = vsyncadd %s189, %s195
          %s197 = smul.addr %s193, 64
          %s198 = scalar_lea.hbm %s0, %s197
          %s200 = sshll.u32 %s192, 4
          %s201 = int_to_ptr.vmem [resolvable:$true] %s200
          %203 = dma.hbm_to_vmem [thread:$0]  %s198, 64, %s201, %s189
        $region20: #{tpu_custom_call.1} parent=15 // pred_fallthru
          _
        // Predicated region
        $region21: #{tpu_custom_call.1} parent=15 // pred_check
          %p204 = pneg %p78
        $region22: #{tpu_custom_call.1} parent=15 // pred_check_branch
          %206 = sbr.rel (%p204) target = $region24
        $region23: #{tpu_custom_call.1} parent=15 // pred_region
          %s207 = sand.u32 %s16, 1
          %s208 = scalar_lea.sflag [#allocation5], %s207
          %s209 = sand.u32 %s68, 1
          %s210 = smul.addr %s209, 4
          %s211 = scalar_lea.vmem [#allocation4], %s210
          %s212 = sadd.s32 %s23, %s24
          %s214 = ssub.s32 64, 64
          %215 = vsyncadd %s208, %s214
          %s216 = smul.addr %s212, 64
          %s217 = scalar_lea.hbm %s1, %s216
          %s219 = sshll.u32 %s211, 4
          %s220 = int_to_ptr.vmem [resolvable:$true] %s219
          %222 = dma.hbm_to_vmem [thread:$0]  %s217, 64, %s220, %s208
        $region24: #{tpu_custom_call.1} parent=15 // pred_fallthru
          _
        // Predicated region
        $region25: #{tpu_custom_call.1} parent=15 // pred_check
          %p223 = pneg %p106
        $region26: #{tpu_custom_call.1} parent=15 // pred_check_branch
          %225 = sbr.rel (%p223) target = $region28
        $region27: #{tpu_custom_call.1} parent=15 // pred_region
          %s226 = sand.u32 %s16, 1
          %s227 = scalar_lea.sflag [#allocation5], %s226
          %s228 = sand.u32 %s96, 1
          %s229 = smul.addr %s228, 8
          %s230 = scalar_lea.vmem [#allocation6], %s229
          %s231 = sadd.s32 %s23, %s24
          %s233 = ssub.s32 128, 128
          %234 = vsyncadd %s227, %s233
          %s235 = smul.addr %s231, 128
          %s236 = scalar_lea.hbm %s2, %s235
          %s238 = sshll.u32 %s230, 4
          %s239 = int_to_ptr.vmem [resolvable:$true] %s238
          %241 = dma.hbm_to_vmem [thread:$0]  %s236, 128, %s239, %s227
        $region28: #{tpu_custom_call.1} parent=15 // pred_fallthru
          _
        // Predicated region
        $region29: #{tpu_custom_call.1} parent=15 // pred_check
          %p242 = pneg %p134
        $region30: #{tpu_custom_call.1} parent=15 // pred_check_branch
          %244 = sbr.rel (%p242) target = $region32
        $region31: #{tpu_custom_call.1} parent=15 // pred_region
          %s245 = sadd.s32 %s23, %s24
          %p246 = scmp.lt.s32.totalorder %s245, 1
          %s247 = scalar_select %p246, %s245, 1
          %s248 = scalar_lea.vmem %s3, %s247
          %s249 = sadd.s32 %s23, %s24
        $region32: #{tpu_custom_call.1} parent=15 // pred_fallthru
          _
      $region16: #{tpu_custom_call.1} parent=5 // pred_fallthru
        _
      %p250 = scmp.le.s32.totalorder 1, %s16
      %p251 = scmp.lt.s32.totalorder %s16, 3
      %p252 = pnand %p250, %p251
      %p253 = pneg %p252
      // Predicated region
      $region33: #{tpu_custom_call.1} parent=5 // pred_check
        _
      $region34: #{tpu_custom_call.1} parent=5 // pred_check_branch
        %255 = sbr.rel (%p252) target = $region36
      $region35: #{tpu_custom_call.1} parent=5 // pred_region
        %s256 = ssub.s32 %s16, 1
        %s257 = sand.u32 %s43, 1
        %s258 = scalar_lea.sflag [#allocation3], %s257
        %s259 = sand.u32 %s43, 1
        %s260 = smul.addr %s259, 4
        %s261 = scalar_lea.vmem [#allocation2], %s260
        // Predicated region
        $region37: #{tpu_custom_call.1} parent=35 // pred_check
          %p262 = pneg %p56
        $region38: #{tpu_custom_call.1} parent=35 // pred_check_branch
          %264 = sbr.rel (%p262) target = $region40
        $region39: #{tpu_custom_call.1} parent=35 // pred_region
          %265 = dma.done %s258, 64
        $region40: #{tpu_custom_call.1} parent=35 // pred_fallthru
          _
        %s266 = sand.u32 %s21, 1
        %s267 = scalar_lea.sflag [#allocation5], %s266
        %s268 = sand.u32 %s71, 1
        %s269 = smul.addr %s268, 4
        %s270 = scalar_lea.vmem [#allocation4], %s269
        // Predicated region
        $region41: #{tpu_custom_call.1} parent=35 // pred_check
          %p271 = pneg %p84
        $region42: #{tpu_custom_call.1} parent=35 // pred_check_branch
          %273 = sbr.rel (%p271) target = $region44
        $region43: #{tpu_custom_call.1} parent=35 // pred_region
          %274 = dma.done %s267, 64
        $region44: #{tpu_custom_call.1} parent=35 // pred_fallthru
          _
        %s275 = sand.u32 %s21, 1
        %s276 = scalar_lea.sflag [#allocation5], %s275
        %s277 = sand.u32 %s99, 1
        %s278 = smul.addr %s277, 8
        %s279 = scalar_lea.vmem [#allocation6], %s278
        // Predicated region
        $region45: #{tpu_custom_call.1} parent=35 // pred_check
          %p280 = pneg %p112
        $region46: #{tpu_custom_call.1} parent=35 // pred_check_branch
          %282 = sbr.rel (%p280) target = $region48
        $region47: #{tpu_custom_call.1} parent=35 // pred_region
          %283 = dma.done %s276, 128
        $region48: #{tpu_custom_call.1} parent=35 // pred_fallthru
          _
        %s284 = sand.u32 %s43, 1
        %s285 = scalar_lea.sflag [#allocation3], %s284
        %s286 = sand.u32 %s43, 1
        %s287 = smul.addr %s286, 4
        %s288 = scalar_lea.vmem [#allocation2], %s287
        %p289 = pneg %p56
        %p290 = pneg %p53
        %s291 = sand.u32 %s21, 1
        %s292 = scalar_lea.sflag [#allocation5], %s291
        %s293 = sand.u32 %s71, 1
        %s294 = smul.addr %s293, 4
        %s295 = scalar_lea.vmem [#allocation4], %s294
        %p296 = pneg %p84
        %p297 = pneg %p81
        %s298 = sand.u32 %s21, 1
        %s299 = scalar_lea.sflag [#allocation5], %s298
        %s300 = sand.u32 %s99, 1
        %s301 = smul.addr %s300, 8
        %s302 = scalar_lea.vmem [#allocation6], %s301
        %p303 = pneg %p112
        %p304 = pneg %p109
        %s305 = sadd.s32 %s25, %s26
        %p306 = scmp.lt.s32.totalorder %s305, 1
        %s307 = scalar_select %p306, %s305, 1
        %s308 = scalar_lea.vmem %s3, %s307
        %p309 = pneg %p140
        %p310 = pneg %p137
        %p311 = pneg %p166
        %p312 = pneg %p163
        %p313 = scmp.lt.s32.totalorder %s25, 1
        %s314 = scalar_select %p313, %s25, 1
        %s315 = smul.addr %s314, 4
        %s316 = scalar_lea.vmem %s4, %s315
        %s317 = sadd.s32 %s25, %s26
        %s318 = sadd.s32 %s25, %s26
        %s319 = sadd.s32 %s25, %s26
        %s320 = sadd.s32 %s25, %s26
        %p321 = scmp.lt.s32.totalorder %s320, 1
        %s322 = scalar_select %p321, %s320, 1
        %s323 = scalar_lea.vmem %s3, %s322
        %s324 = sadd.s32 %s25, %s26
        %p325 = scmp.lt.s32.totalorder %s25, 1
        %s326 = scalar_select %p325, %s25, 1
        %s327 = smul.addr %s326, 4
        %s328 = scalar_lea.vmem %s4, %s327
        %p329 = scmp.eq.s32.totalorder %s26, 0
        // Predicated region
        $region49: #{tpu_custom_call.1} parent=35 // pred_check
          %p330 = pneg %p329
        $region50: #{tpu_custom_call.1} parent=35 // pred_check_branch
          %332 = sbr.rel (%p330) target = $region52
        $region51: #{tpu_custom_call.1} parent=35 // pred_region
          %333 = vst [vmem:[%s328] sm:$0x7] 0.0
        $region52: #{tpu_custom_call.1} parent=35 // pred_fallthru
          _
        %v334 = vld [vmem:[%s261] sm:$0xf]
        %v335 = vld [vmem:[%s270] sm:$0xf]
        %v336 = vld [vmem:[%s279] sm:$0xff]
        %v337 = vld [vmem:[%s323] sm:$0x1]
        %v338 = vlaneseq
        %v339 = vand.u32 %v338, 127
        %s340 = sadd.s32 %s25, %s26
        %s341 = smul.u32 %s340, 128
        %v342 = vstv %s341
        %v343 = vadd.s32 %v342, %v339
        %vm344 = vcmp.lt.s32.totalorder %v343, 256
        %v345 = vsel %vm344, 1, 0
        %v346 = vcvt.s32.f32 %v345
        %vm347 = vcmp.gt.s32.totalorder %v337, 0
        %v348 = vsel %vm347, 1.0, 0.0
        %v349 = vmul.f32 %v348, %v346
        %v350 = vsub.f32 %v334, %v335
        %v351 = vand.u32 2147483647, %v350
        %vm352 = vcmp.lt.f32.partialorder %v351, 1.0
        %v353 = vmul.f32 %v350, 0.5
        %v354 = vmul.f32 %v353, %v350
        %v355 = vsub.f32 %v351, 0.5
        %v356 = vsel %vm352, %v354, %v355
        %vm357 = vcmask 1043456
        %v358 = vsel %vm357, %v356, 0.0
        %v359 = vrot.slane %v358, 4
        %v360 = vadd.f32 %v358, %v359
        %v361 = vrot.slane %v360, 2
        %v362 = vadd.f32 %v360, %v361
        %v363 = vrot.slane %v362, 1
        %v364 = vadd.f32 %v362, %v363
        %v365 = vmul.f32 %v364, %v349
        %v366 = vrot.slane %v336, 4
        %v367 = vmax.f32 %v336, %v366
        %v368 = vrot.slane %v367, 2
        %v369 = vmax.f32 %v367, %v368
        %v370 = vrot.slane %v369, 1
        %v371 = vmax.f32 %v369, %v370
        %v372 = vsub.f32 %v336, %v371
        %v373 = vmul.f32 %v372, 1.442695
        %v374 = vpow.pop %v373
        %v375 = vrot.slane %v374, 4
        %v376 = vadd.f32 %v374, %v375
        %v377 = vrot.slane %v376, 2
        %v378 = vadd.f32 %v376, %v377
        %v379 = vrot.slane %v378, 1
        %v380 = vadd.f32 %v378, %v379
        %v381 = vlog2.pop %v380
        %v382 = vmul.f32 %v381, 0.6931472
        %v383 = vadd.f32 %v382, %v371
        %v384 = vlaneseq
        %v385 = vshrl.u32 %v384, 7
        %v386 = vlaneseq
        %v387 = vshrl.u32 %v386, 7
        %v388 = vsub.s32 0, %v387
        %v389 = vrot.slane %v337, %v388
        %vm390 = vcmp.eq.s32.totalorder %v385, %v389
        %v391 = vsel %vm390, %v336, 0.0
        %v392 = vrot.slane %v391, 4
        %v393 = vadd.f32 %v391, %v392
        %v394 = vrot.slane %v393, 2
        %v395 = vadd.f32 %v393, %v394
        %v396 = vrot.slane %v395, 1
        %v397 = vadd.f32 %v395, %v396
        %v398 = vsub.f32 %v383, %v397
        %v399 = vmul.f32 %v398, %v346
        %v400 = vld [vmem:[%s328] sm:$0x1]
        %v401 = vadd.f32 %v400, %v365
        %402 = vst [vmem:[%s328] sm:$0x1] %v401
        %v403 = vld [vmem:[%s328 + $0x1] sm:$0x1]
        %v404 = vadd.f32 %v403, %v399
        %405 = vst [vmem:[%s328 + $0x1] sm:$0x1] %v404
        %v406 = vld [vmem:[%s328 + $0x2] sm:$0x1]
        %v407 = vadd.f32 %v406, %v349
        %408 = vst [vmem:[%s328 + $0x2] sm:$0x1] %v407
        %p409 = scmp.lt.s32.totalorder %s25, 1
        %s410 = scalar_select %p409, %s25, 1
        %s411 = smul.addr %s410, 4
        %s412 = scalar_lea.vmem %s4, %s411
        // Predicated region
        $region53: #{tpu_custom_call.1} parent=35 // pred_check
          %p413 = pneg %p163
        $region54: #{tpu_custom_call.1} parent=35 // pred_check_branch
          %415 = sbr.rel (%p413) target = $region56
        $region55: #{tpu_custom_call.1} parent=35 // pred_region
          _
        $region56: #{tpu_custom_call.1} parent=35 // pred_fallthru
          _
      $region36: #{tpu_custom_call.1} parent=5 // pred_fallthru
        _
      %p416 = scmp.le.s32.totalorder 2, %s16
      // Predicated region
      $region57: #{tpu_custom_call.1} parent=5 // pred_check
        %p417 = pneg %p416
      $region58: #{tpu_custom_call.1} parent=5 // pred_check_branch
        %419 = sbr.rel (%p417) target = $region60
      $region59: #{tpu_custom_call.1} parent=5 // pred_region
        %s420 = ssub.s32 %s16, 2
        // Predicated region
        $region61: #{tpu_custom_call.1} parent=59 // pred_check
          %p421 = pneg %p169
        $region62: #{tpu_custom_call.1} parent=59 // pred_check_branch
          %423 = sbr.rel (%p421) target = $region64
        $region63: #{tpu_custom_call.1} parent=59 // pred_region
          %p424 = scmp.lt.s32.totalorder %s27, 1
          %s425 = scalar_select %p424, %s27, 1
          %s426 = smul.addr %s425, 4
          %s427 = scalar_lea.vmem %s4, %s426
        $region64: #{tpu_custom_call.1} parent=59 // pred_fallthru
          _
      $region60: #{tpu_custom_call.1} parent=5 // pred_fallthru
        _
    $region6: #{tpu_custom_call.1} parent=1 // loop_footer
      %s20 = sadd.s32 1, %s16
    $region7: #{tpu_custom_call.1} parent=1 // loop_footer_branch
      %15 = sbr.rel target = $region3
    $region8: #{tpu_custom_call.1} parent=1 // loop_exit
      _
    %428 = vsyncpa [#allocation3], 1
    %s429 = scalar_lea.sflag [#allocation3], 1
    %430 = vsyncpa %s429, 1
    %431 = vsyncpa [#allocation5], 1
    %s432 = scalar_lea.sflag [#allocation5], 1
    %433 = vsyncpa %s432, 1

</llo_original>
